<compile_context>
chip_gen: v7x
topology: tpu7x:2x2x1
jax: 0.10.0
libtpu: 0.0.40
codegen_flags: <defaults>
</compile_context>

<pallas_src>
import functools

import jax
import jax.numpy as jnp
import numpy as np
from jax.experimental import pallas as pl
from jax.experimental.pallas import tpu as pltpu


_LANES = 128


# ----------------------------------------------------------------------------
# Separable operator for F.interpolate(mode='bilinear', align_corners=False)
# (identity when out_size == in_size, covering the "shapes equal" branch).
# ----------------------------------------------------------------------------
@functools.lru_cache(maxsize=None)
def _bilinear_matrix(out_size, in_size):
    M = np.zeros((out_size, in_size), np.float32)
    scale = in_size / out_size
    for i in range(out_size):
        src = max((i + 0.5) * scale - 0.5, 0.0)
        i0 = min(int(np.floor(src)), in_size - 1)
        i1 = min(i0 + 1, in_size - 1)
        w1 = src - i0
        M[i, i0] += 1.0 - w1
        M[i, i1] += w1
    return M


# ----------------------------------------------------------------------------
# Pallas kernel: one (batch, channel) plane per grid step.
# ----------------------------------------------------------------------------
def _group_sse_kernel(orig_ref, ds_ref, ur_ref, uct_ref, sse_ref):
    # Separable bilinear upsample: two f32 MXU matmuls (no bf16 round-trips).
    x = jnp.dot(ur_ref[...], ds_ref[0], preferred_element_type=jnp.float32)   # [H, Wd]
    up = jnp.dot(x, uct_ref[...], preferred_element_type=jnp.float32)         # [H, Wp]
    diff = up - orig_ref[0]
    sse = jnp.sum(diff * diff)        # per-plane sum of squared errors (f32)
    # One tiny lane-dense tile per grid step (parallel-safe per-block output);
    # the scalar combine across planes happens in the jitted wrapper.
    sse_ref[...] = jnp.broadcast_to(sse, sse_ref.shape)


# ----------------------------------------------------------------------------
# Jitted implementation (layout plumbing + pallas_call + scalar combine).
# ----------------------------------------------------------------------------
@functools.partial(jax.jit, static_argnames=("od_weight", "blip_clip_weight"))
def _roi_composite_loss_impl(original_img, downsampled_img, caption_similarity,
                             od_weight, blip_clip_weight):
    B, C, H, W = original_img.shape
    Hd, Wd = downsampled_img.shape[2:]
    G = B * C

    # Pad the lane axis to 128 only when W is small (the pad copy is tiny and
    # buys full lane density); for W >= 128 keep NCHW's native lane axis and
    # avoid an extra full-HBM pass over the largest input.
    Wp = _LANES if W < _LANES else W

    Ur = jnp.asarray(_bilinear_matrix(H, Hd), jnp.float32)         # [H, Hd]
    UcT = _bilinear_matrix(W, Wd).T                                # [Wd, W]
    if Wp != W:
        UcT = np.pad(UcT, ((0, 0), (0, Wp - W)))                   # zero cols
    UcT = jnp.asarray(UcT, jnp.float32)                            # [Wd, Wp]

    orig = original_img.astype(jnp.float32).reshape(G, H, W)       # free reshape
    if Wp != W:
        orig = jnp.pad(orig, ((0, 0), (0, 0), (0, Wp - W)))        # padded lanes -> diff == 0
    ds = downsampled_img.astype(jnp.float32).reshape(G, Hd, Wd)

    # VMEM budget: double-buffered per-step blocks + resident operators + f32
    # intermediates, with headroom; capped well below v7x's 64 MiB physical.
    per_step = 4 * (H * Wp + Hd * Wd)
    resident = 4 * (H * Hd + Wd * Wp)
    work = 4 * (H * Wd + 2 * H * Wp)
    vmem_limit = int(min(48 << 20, max(32 << 20, 2 * (2 * per_step + resident + work))))
    # TODO(synk): for very large planes (H*W*4 approaching the VMEM budget) an
    # additional H row-tile grid axis with a scratch accumulator would be needed.

    sse_tiles = pl.pallas_call(
        _group_sse_kernel,
        grid=(G,),
        in_specs=[
            pl.BlockSpec((1, H, Wp), lambda g: (g, 0, 0)),
            pl.BlockSpec((1, Hd, Wd), lambda g: (g, 0, 0)),
            pl.BlockSpec((H, Hd), lambda g: (0, 0)),
            pl.BlockSpec((Wd, Wp), lambda g: (0, 0)),
        ],
        out_specs=pl.BlockSpec((1, 1, _LANES), lambda g: (g, 0, 0)),
        out_shape=jax.ShapeDtypeStruct((G, 1, _LANES), jnp.float32),
        compiler_params=pltpu.CompilerParams(
            dimension_semantics=("parallel",),
            vmem_limit_bytes=vmem_limit),
    )(orig, ds, Ur, UcT)

    sse = sse_tiles[:, 0, 0].reshape(B, C)                          # per-plane SSE
    mse = jnp.sum(sse, axis=1) / jnp.float32(C * H * W)             # per-sample MSE
    sim_loss = 1.0 - caption_similarity.astype(jnp.float32) ** 2    # [B]
    blip_clip = jnp.sum(mse * sim_loss) / jnp.float32(B)

    # TODO(synk): object_detection_loss needs an external YOLO detector; the
    # reference module has detector=None, so od_loss is exactly 0.0.
    od = jnp.float32(0.0)
    weighted_od = jnp.float32(od_weight * 1.5) * od
    weighted_bc = jnp.float32(blip_clip_weight) * blip_clip
    total = weighted_od + weighted_bc

    # NaN/Inf input guard: non-finite values in either image always propagate
    # through the squared-error reduction, so gating on the reduced value
    # reproduces the reference's input check without two extra full-image scan
    # passes.  (Assumes the compute itself cannot overflow on finite image data.)
    ok = jnp.isfinite(blip_clip)
    zero = jnp.float32(0.0)
    total = jnp.where(ok, total, zero)
    loss_components = {                    # device scalars: no host syncs here
        "total": total,
        "object_detection": jnp.where(ok, od, zero),
        "blip_clip": jnp.where(ok, blip_clip, zero),
        "weighted_od": jnp.where(ok, weighted_od, zero),
        "weighted_blip_clip": jnp.where(ok, weighted_bc, zero),
    }
    return total, loss_components


# ----------------------------------------------------------------------------
# Public wrapper (mirrors ROICompositeLoss(od_weight, blip_clip_weight).forward)
# ----------------------------------------------------------------------------
def roi_composite_loss(original_img, downsampled_img, object_mask=None,
                       all_masks=None, epoch=0, *, od_weight=1.0,
                       blip_clip_weight=1.0, caption_similarity=None):
    del object_mask, all_masks, epoch      # unused by the reference forward()
    B = original_img.shape[0]
    if caption_similarity is None:
        # TODO(synk): caption_similarity requires BLIP2 caption generation +
        # CLIP text encoding; the module's models-unavailable fallback is 0.5.
        caption_similarity = jnp.full((B,), 0.5, jnp.float32)
    return _roi_composite_loss_impl(original_img, downsampled_img,
                                    caption_similarity,
                                    od_weight=float(od_weight),
                                    blip_clip_weight=float(blip_clip_weight))


# ----------------------------------------------------------------------------
# Pure-JAX reference (same fallback semantics) for a correctness check
# ----------------------------------------------------------------------------
def _reference(original_img, downsampled_img, od_weight=1.0,
               blip_clip_weight=1.0, caption_similarity=0.5):
    B, C, H, W = original_img.shape
    Hd, Wd = downsampled_img.shape[2:]
    Ur = jnp.asarray(_bilinear_matrix(H, Hd))
    Uc = jnp.asarray(_bilinear_matrix(W, Wd))
    up = jnp.einsum('hk,bckv,wv->bchw', Ur,
                    downsampled_img.astype(jnp.float32), Uc)
    mse = jnp.mean((up - original_img.astype(jnp.float32)) ** 2, axis=(1, 2, 3))
    blip = jnp.mean(mse * (1.0 - caption_similarity ** 2))
    return od_weight * 1.5 * 0.0 + blip_clip_weight * blip


# ----------------------------------------------------------------------------
# Driver
# ----------------------------------------------------------------------------
if __name__ == "__main__":
    key = jax.random.PRNGKey(0)
    k1, k2 = jax.random.split(key, 2)

    B, C, H, W = 2, 3, 32, 32
    Hd, Wd = 16, 16

    original_img = jax.random.uniform(k1, (B, C, H, W), jnp.float32)
    downsampled_img = jax.random.uniform(k2, (B, C, Hd, Wd), jnp.float32)

    total, comps = roi_composite_loss(original_img, downsampled_img, epoch=0)
    total = jax.block_until_ready(total)

    got = float(total)
    ref = float(_reference(original_img, downsampled_img))
    assert np.isfinite(got), "non-finite total loss"
    assert abs(got - ref) <= 2e-2 * abs(ref) + 1e-4, (got, ref)
    assert abs(float(comps["blip_clip"]) - ref) <= 2e-2 * abs(ref) + 1e-4
    assert float(comps["object_detection"]) == 0.0

    # NaN/Inf guard path must short-circuit to 0.0 like the reference module.
    bad_input = original_img.at[0, 0, 0, 0].set(jnp.nan)
    total_bad, _ = roi_composite_loss(bad_input, downsampled_img)
    total_bad = jax.block_until_ready(total_bad)
    assert float(total_bad) == 0.0, float(total_bad)

    print("KERNEL_OK")
</pallas_src>

<mosaic_0001>
module attributes {stable_mosaic.version = 11 : i64} {
  func.func @_group_sse_kernel(%arg0: i32, %arg1: memref<1x32x128xf32, #tpu.memory_space<vmem>>, %arg2: memref<1x16x16xf32, #tpu.memory_space<vmem>>, %arg3: memref<32x16xf32, #tpu.memory_space<vmem>>, %arg4: memref<16x128xf32, #tpu.memory_space<vmem>>, %arg5: memref<1x1x128xf32, #tpu.memory_space<vmem>>) attributes {dimension_semantics = [#tpu.dimension_semantics<parallel>], iteration_bounds = array<i64: 6>, scalar_prefetch = 0 : i64, scratch_operands = 0 : i64, tpu.core_type = #tpu.core_type<tc>, window_params = [{transform_indices = @transform_0, window_bounds = array<i64: 1, 32, 128>}, {transform_indices = @transform_1, window_bounds = array<i64: 1, 16, 16>}, {pipeline_mode = #tpu.pipeline_mode<synchronous>, transform_indices = @transform_2, window_bounds = array<i64: 32, 16>}, {pipeline_mode = #tpu.pipeline_mode<synchronous>, transform_indices = @transform_3, window_bounds = array<i64: 16, 128>}, {transform_indices = @transform_4, window_bounds = array<i64: 1, 1, 128>}]} {
    %c0 = arith.constant 0 : index
    %c0_0 = arith.constant 0 : index
    %0 = vector.load %arg3[%c0, %c0_0] : memref<32x16xf32, #tpu.memory_space<vmem>>, vector<32x16xf32>
    %c0_1 = arith.constant 0 : index
    %c0_2 = arith.constant 0 : index
    %c0_3 = arith.constant 0 : index
    %1 = vector.load %arg2[%c0_1, %c0_2, %c0_3] : memref<1x16x16xf32, #tpu.memory_space<vmem>>, vector<1x16x16xf32>
    %2 = vector.shape_cast %1 : vector<1x16x16xf32> to vector<16x16xf32>
    %cst = arith.constant dense<0.000000e+00> : vector<32x16xf32>
    %3 = tpu.matmul %0, %2, %cst {dimension_numbers = #tpu.dot_dimension_numbers<[1], [0], [0], [1], [0, 0, 1, 1], [], []>} : vector<32x16xf32>, vector<16x16xf32>, vector<32x16xf32> -> vector<32x16xf32>
    %c0_4 = arith.constant 0 : index
    %c0_5 = arith.constant 0 : index
    %4 = vector.load %arg4[%c0_4, %c0_5] : memref<16x128xf32, #tpu.memory_space<vmem>>, vector<16x128xf32>
    %cst_6 = arith.constant dense<0.000000e+00> : vector<32x128xf32>
    %5 = tpu.matmul %3, %4, %cst_6 {dimension_numbers = #tpu.dot_dimension_numbers<[1], [0], [0], [1], [0, 0, 1, 1], [], []>} : vector<32x16xf32>, vector<16x128xf32>, vector<32x128xf32> -> vector<32x128xf32>
    %c0_7 = arith.constant 0 : index
    %c0_8 = arith.constant 0 : index
    %c0_9 = arith.constant 0 : index
    %6 = vector.load %arg1[%c0_7, %c0_8, %c0_9] : memref<1x32x128xf32, #tpu.memory_space<vmem>>, vector<1x32x128xf32>
    %7 = vector.shape_cast %6 : vector<1x32x128xf32> to vector<32x128xf32>
    %8 = arith.subf %5, %7 : vector<32x128xf32>
    %9 = arith.mulf %8, %8 : vector<32x128xf32>
    %10 = vector.shape_cast %9 : vector<32x128xf32> to vector<1x32x128xf32>
    %cst_10 = arith.constant dense<0.000000e+00> : vector<1xf32>
    %11 = vector.multi_reduction <add>, %10, %cst_10 [1, 2] : vector<1x32x128xf32> to vector<1xf32>
    %12 = vector.shape_cast %11 : vector<1xf32> to vector<1x1x1xf32>
    %13 = vector.extract %12[0, 0, 0] : f32 from vector<1x1x1xf32>
    %14 = vector.broadcast %13 : f32 to vector<1x1x128xf32>
    %c0_11 = arith.constant 0 : index
    %c0_12 = arith.constant 0 : index
    %c0_13 = arith.constant 0 : index
    %15 = vector.load %arg5[%c0_11, %c0_12, %c0_13] : memref<1x1x128xf32, #tpu.memory_space<vmem>>, vector<1x1x128xf32>
    tpu.vector_store %arg5[%c0_11, %c0_12, %c0_13], %14 {strides = array<i32>} : memref<1x1x128xf32, #tpu.memory_space<vmem>>, vector<1x1x128xf32>,
    return
  }
  func.func @transform_0(%arg0: i32) -> (i32, i32, i32) {
    %c0_i32 = arith.constant 0 : i32
    %c0_i32_0 = arith.constant 0 : i32
    %c0_i32_1 = arith.constant 0 : i32
    return %arg0, %c0_i32, %c0_i32_0 : i32, i32, i32
  }
  func.func @transform_1(%arg0: i32) -> (i32, i32, i32) {
    %c0_i32 = arith.constant 0 : i32
    %c0_i32_0 = arith.constant 0 : i32
    %c0_i32_1 = arith.constant 0 : i32
    return %arg0, %c0_i32, %c0_i32_0 : i32, i32, i32
  }
  func.func @transform_2(%arg0: i32) -> (i32, i32) {
    %c0_i32 = arith.constant 0 : i32
    %c0_i32_0 = arith.constant 0 : i32
    %c0_i32_1 = arith.constant 0 : i32
    return %c0_i32, %c0_i32_0 : i32, i32
  }
  func.func @transform_3(%arg0: i32) -> (i32, i32) {
    %c0_i32 = arith.constant 0 : i32
    %c0_i32_0 = arith.constant 0 : i32
    %c0_i32_1 = arith.constant 0 : i32
    return %c0_i32, %c0_i32_0 : i32, i32
  }
  func.func @transform_4(%arg0: i32) -> (i32, i32, i32) {
    %c0_i32 = arith.constant 0 : i32
    %c0_i32_0 = arith.constant 0 : i32
    %c0_i32_1 = arith.constant 0 : i32
    return %arg0, %c0_i32, %c0_i32_0 : i32, i32, i32
  }
}

</mosaic_0001>

<llo_original>
// kernel: squeeze.1
$region0: #{squeeze.1}
  %s0 = inlined_call_operand.vmem [shape: f32[6], index: 0, kind: input, shape index: {}]
  %s1 = inlined_call_operand.vmem [shape: f32[2,3], index: 1, kind: output, shape index: {}]
  $region1: #{squeeze.1} parent=0
    #allocation0 [shape = 'u8[4096]{0}', space=vmem, size = 0x1000, scoped, tag = 'scoped mem for output reshape']
    #allocation1 [shape = 'u8[4096]{0}', space=vmem, size = 0x1000, scoped, tag = 'scoped mem for input reshape']
    %s3 = sshllo.u32 0, 1
    %v4 = vld [vmem:[%s0] sm:%s3]
    %5 = vst [vmem:[#allocation1] sm:%s3] %v4
    %v6 = vld [vmem:[#allocation1] sm:$0x1]
    %vm7 = vcmask 23552
    %8 = vst.msk [vmem:[#allocation0] sm:$0x1] %vm7, %v6
    %v9 = vld [vmem:[#allocation1] sm:$0x1]
    %10 = vrot.lane.b32.xlu0 %v9, 125
    %v11 = vpop.permute.xlu0 %10
    %vm12 = vcmask 23552
    %s13 = scalar_lea.vmem [#allocation0], 1
    %14 = vst.msk [vmem:[%s13] sm:$0x1] %vm12, %v11
    %s16 = sshllo.u32 0, 2
    %v18 = vld [vmem:[#allocation0] sm:%s16]
    %s19 = sshllo.u32 0, 2
    %20 = vst [vmem:[%s1] sm:%s19] %v18

// kernel: _roi_composite_loss_impl.1
$region0: #{_roi_composite_loss_impl.1}
  #allocation0 [shape = 'u32[]', space=smem, size = 0x4, offset = 0x4, fixed_abs, tag = 'smem constant byte address 0x4 - core index']
  #allocation1 [shape = 'u32[144,128]{1,0:T(1,128)}', space=vmem, size = 0x12000, scoped, tag = 'internal scratch']
  %s0 = inlined_call_operand.vmem [shape: f32[6,32,128], index: 0, kind: input, shape index: {}]
  %s1 = inlined_call_operand.vmem [shape: f32[6,16,16], index: 1, kind: input, shape index: {}]
  %s2 = inlined_call_operand.vmem [shape: f32[32,16], index: 2, kind: input, shape index: {}]
  %s3 = inlined_call_operand.vmem [shape: f32[16,128], index: 3, kind: input, shape index: {}]
  %s4 = inlined_call_operand.vmem [shape: f32[6,1,128], index: 4, kind: output, shape index: {}]
  %s5 = sld [smem:[#allocation0]]
  $region49: #{_roi_composite_loss_impl.1} parent=0
    _
  %s7 = ssub.s32 1, %s5
  %s8 = scalar_select 0, %s7, %s5
  loop: start=0, step=1, limit=8
  $region2: #{_roi_composite_loss_impl.1} parent=0 // loop_pre_header
    _
  $region3: #{_roi_composite_loss_impl.1} parent=0 // loop_header
    %s10 = sphi 0, %s14
    %p11 = scmp.ge.s32.totalorder %s10, 8
    %s20 = sphi 0, %s22
    %s23 = sphi 0, %s20
    %s24 = sphi 0, %s23
    %s40 = sphi 0, %s24
    %s46 = sphi 0, %s48
    %s49 = sphi 0, %s46
    %s50 = sphi 0, %s49
    %s66 = sphi 0, %s50
    %s70 = sphi 0, %s70
    %s72 = sphi 0, %s70
    %s73 = sphi 0, %s72
    %s87 = sphi 0, %s73
    %s91 = sphi 0, %s91
    %s93 = sphi 0, %s91
    %s94 = sphi 0, %s93
    %s108 = sphi 0, %s94
    %s114 = sphi 0, %s116
    %s117 = sphi 0, %s114
    %s118 = sphi 0, %s117
    %s134 = sphi 0, %s118
  $region4: #{_roi_composite_loss_impl.1} parent=0 // loop_header_branch
    %13 = sbr.rel (%p11) target = $region8
  $region5: #{_roi_composite_loss_impl.1} parent=0 // loop_body
    %s15 = ssub.s32 %s10, 1
    %s16 = ssub.s32 %s10, 2
    %s17 = sadd.s32 %s10, 1
    %s18 = ssub.s32 %s10, %s17
    %p19 = scmp.eq.s32.totalorder %s18, 0
    %s21 = sadd.s32 %s20, 1
    %s22 = scalar_select %p19, %s20, %s21
    %p25 = pneg %p19
    %p26 = scmp.eq.s32.totalorder %s10, 5
    %p27 = por %p25, %p26
    %p28 = scmp.ne.s32.totalorder %s20, %s23
    %p29 = scmp.eq.s32.totalorder %s10, 0
    %p30 = por %p28, %p29
    %p31 = scmp.ne.s32.totalorder %s20, %s23
    %p32 = scmp.eq.s32.totalorder %s15, 5
    %p33 = por %p31, %p32
    %p34 = scmp.ne.s32.totalorder %s23, %s24
    %p35 = scmp.eq.s32.totalorder %s15, 0
    %p36 = por %p34, %p35
    %p37 = scmp.ne.s32.totalorder %s23, %s24
    %p38 = scmp.eq.s32.totalorder %s16, 5
    %p39 = por %p37, %p38
    %p41 = scmp.ne.s32.totalorder %s24, %s40
    %p42 = scmp.eq.s32.totalorder %s16, 0
    %p43 = por %p41, %p42
    %s44 = ssub.s32 %s10, %s17
    %p45 = scmp.eq.s32.totalorder %s44, 0
    %s47 = sadd.s32 %s46, 1
    %s48 = scalar_select %p45, %s46, %s47
    %p51 = pneg %p45
    %p52 = scmp.eq.s32.totalorder %s10, 5
    %p53 = por %p51, %p52
    %p54 = scmp.ne.s32.totalorder %s46, %s49
    %p55 = scmp.eq.s32.totalorder %s10, 0
    %p56 = por %p54, %p55
    %p57 = scmp.ne.s32.totalorder %s46, %s49
    %p58 = scmp.eq.s32.totalorder %s15, 5
    %p59 = por %p57, %p58
    %p60 = scmp.ne.s32.totalorder %s49, %s50
    %p61 = scmp.eq.s32.totalorder %s15, 0
    %p62 = por %p60, %p61
    %p63 = scmp.ne.s32.totalorder %s49, %s50
    %p64 = scmp.eq.s32.totalorder %s16, 5
    %p65 = por %p63, %p64
    %p67 = scmp.ne.s32.totalorder %s50, %s66
    %p68 = scmp.eq.s32.totalorder %s16, 0
    %p69 = por %p67, %p68
    %s71 = sadd.s32 %s70, 1
    %p74 = scmp.eq.s32.totalorder %s10, 5
    %p75 = scmp.ne.s32.totalorder %s70, %s72
    %p76 = scmp.eq.s32.totalorder %s10, 0
    %p77 = por %p75, %p76
    %p78 = scmp.ne.s32.totalorder %s70, %s72
    %p79 = scmp.eq.s32.totalorder %s15, 5
    %p80 = por %p78, %p79
    %p81 = scmp.ne.s32.totalorder %s72, %s73
    %p82 = scmp.eq.s32.totalorder %s15, 0
    %p83 = por %p81, %p82
    %p84 = scmp.ne.s32.totalorder %s72, %s73
    %p85 = scmp.eq.s32.totalorder %s16, 5
    %p86 = por %p84, %p85
    %p88 = scmp.ne.s32.totalorder %s73, %s87
    %p89 = scmp.eq.s32.totalorder %s16, 0
    %p90 = por %p88, %p89
    %s92 = sadd.s32 %s91, 1
    %p95 = scmp.eq.s32.totalorder %s10, 5
    %p96 = scmp.ne.s32.totalorder %s91, %s93
    %p97 = scmp.eq.s32.totalorder %s10, 0
    %p98 = por %p96, %p97
    %p99 = scmp.ne.s32.totalorder %s91, %s93
    %p100 = scmp.eq.s32.totalorder %s15, 5
    %p101 = por %p99, %p100
    %p102 = scmp.ne.s32.totalorder %s93, %s94
    %p103 = scmp.eq.s32.totalorder %s15, 0
    %p104 = por %p102, %p103
    %p105 = scmp.ne.s32.totalorder %s93, %s94
    %p106 = scmp.eq.s32.totalorder %s16, 5
    %p107 = por %p105, %p106
    %p109 = scmp.ne.s32.totalorder %s94, %s108
    %p110 = scmp.eq.s32.totalorder %s16, 0
    %p111 = por %p109, %p110
    %s112 = ssub.s32 %s10, %s17
    %p113 = scmp.eq.s32.totalorder %s112, 0
    %s115 = sadd.s32 %s114, 1
    %s116 = scalar_select %p113, %s114, %s115
    %p119 = pneg %p113
    %p120 = scmp.eq.s32.totalorder %s10, 5
    %p121 = por %p119, %p120
    %p122 = scmp.ne.s32.totalorder %s114, %s117
    %p123 = scmp.eq.s32.totalorder %s10, 0
    %p124 = por %p122, %p123
    %p125 = scmp.ne.s32.totalorder %s114, %s117
    %p126 = scmp.eq.s32.totalorder %s15, 5
    %p127 = por %p125, %p126
    %p128 = scmp.ne.s32.totalorder %s117, %s118
    %p129 = scmp.eq.s32.totalorder %s15, 0
    %p130 = por %p128, %p129
    %p131 = scmp.ne.s32.totalorder %s117, %s118
    %p132 = scmp.eq.s32.totalorder %s16, 5
    %p133 = por %p131, %p132
    %p135 = scmp.ne.s32.totalorder %s118, %s134
    %p136 = scmp.eq.s32.totalorder %s16, 0
    %p137 = por %p135, %p136
    %p138 = scmp.le.s32.totalorder 1, %s10
    %p139 = scmp.lt.s32.totalorder %s10, 7
    %p140 = pnand %p138, %p139
    %p141 = pneg %p140
    // Predicated region
    $region9: #{_roi_composite_loss_impl.1} parent=5 // pred_check
      _
    $region10: #{_roi_composite_loss_impl.1} parent=5 // pred_check_branch
      %143 = sbr.rel (%p140) target = $region12
    $region11: #{_roi_composite_loss_impl.1} parent=5 // pred_region
      %s144 = ssub.s32 %s10, 1
      // Predicated region
      $region13: #{_roi_composite_loss_impl.1} parent=11 // pred_check
        %p145 = pneg %p83
      $region14: #{_roi_composite_loss_impl.1} parent=11 // pred_check_branch
        %147 = sbr.rel (%p145) target = $region16
      $region15: #{_roi_composite_loss_impl.1} parent=11 // pred_region
        _
      $region16: #{_roi_composite_loss_impl.1} parent=11 // pred_fallthru
        _
      // Predicated region
      $region17: #{_roi_composite_loss_impl.1} parent=11 // pred_check
        %p148 = pneg %p104
      $region18: #{_roi_composite_loss_impl.1} parent=11 // pred_check_branch
        %150 = sbr.rel (%p148) target = $region20
      $region19: #{_roi_composite_loss_impl.1} parent=11 // pred_region
        _
      $region20: #{_roi_composite_loss_impl.1} parent=11 // pred_fallthru
        _
    $region12: #{_roi_composite_loss_impl.1} parent=5 // pred_fallthru
      _
    %p151 = scmp.lt.s32.totalorder %s10, 6
    // Predicated region
    $region21: #{_roi_composite_loss_impl.1} parent=5 // pred_check
      %p152 = pneg %p151
    $region22: #{_roi_composite_loss_impl.1} parent=5 // pred_check_branch
      %154 = sbr.rel (%p152) target = $region24
    $region23: #{_roi_composite_loss_impl.1} parent=5 // pred_region
      // Predicated region
      $region25: #{_roi_composite_loss_impl.1} parent=23 // pred_check
        %p155 = pneg %p30
      $region26: #{_roi_composite_loss_impl.1} parent=23 // pred_check_branch
        %157 = sbr.rel (%p155) target = $region28
      $region27: #{_roi_composite_loss_impl.1} parent=23 // pred_region
        %p158 = scmp.lt.s32.totalorder %s10, 5
        %s159 = scalar_select %p158, %s10, 5
        %s160 = smul.addr %s159, 4
        %s161 = smul.addr %s160, 8
        %s162 = scalar_lea.vmem %s0, %s161
      $region28: #{_roi_composite_loss_impl.1} parent=23 // pred_fallthru
        _
      // Predicated region
      $region29: #{_roi_composite_loss_impl.1} parent=23 // pred_check
        %p163 = pneg %p56
      $region30: #{_roi_composite_loss_impl.1} parent=23 // pred_check_branch
        %165 = sbr.rel (%p163) target = $region32
      $region31: #{_roi_composite_loss_impl.1} parent=23 // pred_region
        %p166 = scmp.lt.s32.totalorder %s10, 5
        %s167 = scalar_select %p166, %s10, 5
        %s168 = smul.addr %s167, 2
        %s169 = smul.addr %s168, 8
        %s170 = scalar_lea.vmem %s1, %s169
      $region32: #{_roi_composite_loss_impl.1} parent=23 // pred_fallthru
        _
    $region24: #{_roi_composite_loss_impl.1} parent=5 // pred_fallthru
      _
    %p171 = scmp.le.s32.totalorder 1, %s10
    %p172 = scmp.lt.s32.totalorder %s10, 7
    %p173 = pnand %p171, %p172
    %p174 = pneg %p173
    // Predicated region
    $region33: #{_roi_composite_loss_impl.1} parent=5 // pred_check
      _
    $region34: #{_roi_composite_loss_impl.1} parent=5 // pred_check_branch
      %176 = sbr.rel (%p173) target = $region36
    $region35: #{_roi_composite_loss_impl.1} parent=5 // pred_region
      %s177 = ssub.s32 %s10, 1
      %p178 = scmp.lt.s32.totalorder %s15, 5
      %s179 = scalar_select %p178, %s15, 5
      %s180 = smul.addr %s179, 4
      %s181 = smul.addr %s180, 8
      %s182 = scalar_lea.vmem %s0, %s181
      %p183 = pneg %p36
      %p184 = pneg %p33
      %p185 = scmp.lt.s32.totalorder %s15, 5
      %s186 = scalar_select %p185, %s15, 5
      %s187 = smul.addr %s186, 2
      %s188 = smul.addr %s187, 8
      %s189 = scalar_lea.vmem %s1, %s188
      %p190 = pneg %p62
      %p191 = pneg %p59
      %p192 = pneg %p83
      %p193 = pneg %p80
      %p194 = pneg %p104
      %p195 = pneg %p101
      %p196 = pneg %p130
      %p197 = pneg %p127
      %p198 = scmp.lt.s32.totalorder %s15, 5
      %s199 = scalar_select %p198, %s15, 5
      %s200 = scalar_lea.vmem %s4, %s199
      %p201 = scmp.lt.s32.totalorder %s15, 5
      %s202 = scalar_select %p201, %s15, 5
      %s203 = smul.addr %s202, 4
      %s204 = smul.addr %s203, 8
      %s205 = scalar_lea.vmem %s0, %s204
      %p206 = scmp.lt.s32.totalorder %s15, 5
      %s207 = scalar_select %p206, %s15, 5
      %s208 = smul.addr %s207, 2
      %s209 = smul.addr %s208, 8
      %s210 = scalar_lea.vmem %s1, %s209
      %p211 = scmp.lt.s32.totalorder %s15, 5
      %s212 = scalar_select %p211, %s15, 5
      %s213 = scalar_lea.vmem %s4, %s212
      %v214 = vld [vmem:[%s2] sm:$0xff]
      %v215 = vld [vmem:[%s2 + $0x8] sm:$0xff]
      %v216 = vld [vmem:[%s2 + $0x10] sm:$0xff]
      %v217 = vld [vmem:[%s2 + $0x18] sm:$0xff]
      %v218 = vld [vmem:[%s210] sm:$0xff]
      %v219 = vld [vmem:[%s210 + $0x8] sm:$0xff]
      %vm220 = vcmask 130048
      %v222 = vsel %vm220, %v214, 0
      %v225 = vsel %vm220, %v215, 0
      %v228 = vsel %vm220, %v216, 0
      %v231 = vsel %vm220, %v217, 0
      %233 = vmatprep.subr.mxu0 0.0
      %234 = vmatpush1.msra.mxu0 %v218
      %235 = vmatprep.subr.mxu0 0.0
      %236 = vmatpush1.msra.mxu0 %v219
      %237 = vmatprep.subr.mxu0 0.0
      %238 = vmatpush1.msra.mxu0 0.0
      %239 = vmatprep.subr.mxu0 0.0
      %240 = vmatpush1.msra.mxu0 0.0
      %241 = vmatprep.subr.mxu0 0.0
      %242 = vmatpush1.msra.mxu0 0.0
      %243 = vmatprep.subr.mxu0 0.0
      %244 = vmatpush1.msra.mxu0 0.0
      %245 = vmatprep.subr.mxu0 0.0
      %246 = vmatpush1.msra.mxu0 0.0
      %247 = vmatprep.subr.mxu0 0.0
      %248 = vmatpush1.msra.mxu0 0.0
      %249 = vmatprep.subr.mxu0 0.0
      %250 = vmatpush1.msra.mxu0 0.0
      %251 = vmatprep.subr.mxu0 0.0
      %252 = vmatpush1.msra.mxu0 0.0
      %253 = vmatprep.subr.mxu0 0.0
      %254 = vmatpush1.msra.mxu0 0.0
      %255 = vmatprep.subr.mxu0 0.0
      %256 = vmatpush1.msra.mxu0 0.0
      %257 = vmatprep.subr.mxu0 0.0
      %258 = vmatpush1.msra.mxu0 0.0
      %259 = vmatprep.subr.mxu0 0.0
      %260 = vmatpush1.msra.mxu0 0.0
      %261 = vmatprep.subr.mxu0 0.0
      %262 = vmatpush1.msra.mxu0 0.0
      %263 = vmatprep.subr.mxu0 0.0
      %264 = vmatpush1.msra.mxu0 0.0
      %265 = vmatprep.subr.mxu0 0.0
      %266 = vmatpush1.msra.mxu0 0.0
      %267 = vmatprep.subr.mxu0 0.0
      %268 = vmatpush1.msra.mxu0 0.0
      %269 = vmatprep.subr.mxu0 0.0
      %270 = vmatpush1.msra.mxu0 0.0
      %271 = vmatprep.subr.mxu0 0.0
      %272 = vmatpush1.msra.mxu0 0.0
      %273 = vmatprep.subr.mxu0 0.0
      %274 = vmatpush1.msra.mxu0 0.0
      %275 = vmatprep.subr.mxu0 0.0
      %276 = vmatpush1.msra.mxu0 0.0
      %277 = vmatprep.subr.mxu0 0.0
      %278 = vmatpush1.msra.mxu0 0.0
      %279 = vmatprep.subr.mxu0 0.0
      %280 = vmatpush1.msra.mxu0 0.0
      %281 = vmatprep.subr.mxu0 0.0
      %282 = vmatpush1.msra.mxu0 0.0
      %283 = vmatprep.subr.mxu0 0.0
      %284 = vmatpush1.msra.mxu0 0.0
      %285 = vmatprep.subr.mxu0 0.0
      %286 = vmatpush1.msra.mxu0 0.0
      %287 = vmatprep.subr.mxu0 0.0
      %288 = vmatpush1.msra.mxu0 0.0
      %289 = vmatprep.subr.mxu0 0.0
      %290 = vmatpush1.msra.mxu0 0.0
      %291 = vmatprep.subr.mxu0 0.0
      %292 = vmatpush1.msra.mxu0 0.0
      %293 = vmatprep.subr.mxu0 0.0
      %294 = vmatpush1.msra.mxu0 0.0
      %295 = vmatprep.subr.mxu0 0.0
      %296 = vmatpush1.msra.mxu0 0.0
      %297 = vmatprep.mubr.f32.mxu0 0.0
      %298 = vmatmul.mubr.f32.gmra.mrb[0].mxu0 %v222
      %v299 = vpop.f32.mrb[0].mxu0
      %v300 = vadd.f32 0.0, %v299
      %v301 = vpop.f32.mrb[0].mxu0
      %302 = vmatprep.mubr.f32.mxu0 0.0
      %303 = vmatmul.mubr.f32.gmra.mrb[0].mxu0 %v225
      %v304 = vpop.f32.mrb[0].mxu0
      %v305 = vadd.f32 0.0, %v304
      %v306 = vpop.f32.mrb[0].mxu0
      %307 = vmatprep.mubr.f32.mxu0 0.0
      %308 = vmatmul.mubr.f32.gmra.mrb[0].mxu0 %v228
      %v309 = vpop.f32.mrb[0].mxu0
      %v310 = vadd.f32 0.0, %v309
      %v311 = vpop.f32.mrb[0].mxu0
      %312 = vmatprep.mubr.f32.mxu0 0.0
      %313 = vmatmul.mubr.f32.gmra.mrb[0].mxu0 %v231
      %v314 = vpop.f32.mrb[0].mxu0
      %v315 = vadd.f32 0.0, %v314
      %v316 = vpop.f32.mrb[0].mxu0
      %317 = vdwg.mxu0
      %v318 = vld [vmem:[%s3] sm:$0xff]
      %v319 = vld [vmem:[%s3 + $0x8] sm:$0xff]
      %v321 = vsel %vm220, %v300, 0
      %v324 = vsel %vm220, %v305, 0
      %v327 = vsel %vm220, %v310, 0
      %v330 = vsel %vm220, %v315, 0
      %332 = vmatprep.subr.mxu0 0.0
      %333 = vmatpush1.msra.mxu0 %v318
      %334 = vmatprep.subr.mxu0 0.0
      %335 = vmatpush1.msra.mxu0 %v319
      %336 = vmatprep.subr.mxu0 0.0
      %337 = vmatpush1.msra.mxu0 0.0
      %338 = vmatprep.subr.mxu0 0.0
      %339 = vmatpush1.msra.mxu0 0.0
      %340 = vmatprep.subr.mxu0 0.0
      %341 = vmatpush1.msra.mxu0 0.0
      %342 = vmatprep.subr.mxu0 0.0
      %343 = vmatpush1.msra.mxu0 0.0
      %344 = vmatprep.subr.mxu0 0.0
      %345 = vmatpush1.msra.mxu0 0.0
      %346 = vmatprep.subr.mxu0 0.0
      %347 = vmatpush1.msra.mxu0 0.0
      %348 = vmatprep.subr.mxu0 0.0
      %349 = vmatpush1.msra.mxu0 0.0
      %350 = vmatprep.subr.mxu0 0.0
      %351 = vmatpush1.msra.mxu0 0.0
      %352 = vmatprep.subr.mxu0 0.0
      %353 = vmatpush1.msra.mxu0 0.0
      %354 = vmatprep.subr.mxu0 0.0
      %355 = vmatpush1.msra.mxu0 0.0
      %356 = vmatprep.subr.mxu0 0.0
      %357 = vmatpush1.msra.mxu0 0.0
      %358 = vmatprep.subr.mxu0 0.0
      %359 = vmatpush1.msra.mxu0 0.0
      %360 = vmatprep.subr.mxu0 0.0
      %361 = vmatpush1.msra.mxu0 0.0
      %362 = vmatprep.subr.mxu0 0.0
      %363 = vmatpush1.msra.mxu0 0.0
      %364 = vmatprep.subr.mxu0 0.0
      %365 = vmatpush1.msra.mxu0 0.0
      %366 = vmatprep.subr.mxu0 0.0
      %367 = vmatpush1.msra.mxu0 0.0
      %368 = vmatprep.subr.mxu0 0.0
      %369 = vmatpush1.msra.mxu0 0.0
      %370 = vmatprep.subr.mxu0 0.0
      %371 = vmatpush1.msra.mxu0 0.0
      %372 = vmatprep.subr.mxu0 0.0
      %373 = vmatpush1.msra.mxu0 0.0
      %374 = vmatprep.subr.mxu0 0.0
      %375 = vmatpush1.msra.mxu0 0.0
      %376 = vmatprep.subr.mxu0 0.0
      %377 = vmatpush1.msra.mxu0 0.0
      %378 = vmatprep.subr.mxu0 0.0
      %379 = vmatpush1.msra.mxu0 0.0
      %380 = vmatprep.subr.mxu0 0.0
      %381 = vmatpush1.msra.mxu0 0.0
      %382 = vmatprep.subr.mxu0 0.0
      %383 = vmatpush1.msra.mxu0 0.0
      %384 = vmatprep.subr.mxu0 0.0
      %385 = vmatpush1.msra.mxu0 0.0
      %386 = vmatprep.subr.mxu0 0.0
      %387 = vmatpush1.msra.mxu0 0.0
      %388 = vmatprep.subr.mxu0 0.0
      %389 = vmatpush1.msra.mxu0 0.0
      %390 = vmatprep.subr.mxu0 0.0
      %391 = vmatpush1.msra.mxu0 0.0
      %392 = vmatprep.subr.mxu0 0.0
      %393 = vmatpush1.msra.mxu0 0.0
      %394 = vmatprep.subr.mxu0 0.0
      %395 = vmatpush1.msra.mxu0 0.0
      %396 = vmatprep.mubr.f32.mxu0 0.0
      %397 = vmatmul.mubr.f32.gmra.mrb[0].mxu0 %v321
      %v398 = vpop.f32.mrb[0].mxu0
      %v399 = vadd.f32 0.0, %v398
      %v400 = vpop.f32.mrb[0].mxu0
      %401 = vmatprep.mubr.f32.mxu0 0.0
      %402 = vmatmul.mubr.f32.gmra.mrb[0].mxu0 %v324
      %v403 = vpop.f32.mrb[0].mxu0
      %v404 = vadd.f32 0.0, %v403
      %v405 = vpop.f32.mrb[0].mxu0
      %406 = vmatprep.mubr.f32.mxu0 0.0
      %407 = vmatmul.mubr.f32.gmra.mrb[0].mxu0 %v327
      %v408 = vpop.f32.mrb[0].mxu0
      %v409 = vadd.f32 0.0, %v408
      %v410 = vpop.f32.mrb[0].mxu0
      %411 = vmatprep.mubr.f32.mxu0 0.0
      %412 = vmatmul.mubr.f32.gmra.mrb[0].mxu0 %v330
      %v413 = vpop.f32.mrb[0].mxu0
      %v414 = vadd.f32 0.0, %v413
      %v415 = vpop.f32.mrb[0].mxu0
      %416 = vdwg.mxu0
      %v417 = vld [vmem:[%s205] sm:$0xff]
      %v418 = vld [vmem:[%s205 + $0x8] sm:$0xff]
      %v419 = vld [vmem:[%s205 + $0x10] sm:$0xff]
      %v420 = vld [vmem:[%s205 + $0x18] sm:$0xff]
      %v421 = vsub.f32 %v399, %v417
      %v422 = vsub.f32 %v404, %v418
      %v423 = vsub.f32 %v409, %v419
      %v424 = vsub.f32 %v414, %v420
      %v425 = vmul.f32 %v421, %v421
      %v426 = vmul.f32 %v422, %v422
      %v427 = vmul.f32 %v423, %v423
      %v428 = vmul.f32 %v424, %v424
      %v429 = vadd.f32 %v425, %v426
      %v430 = vadd.f32 %v429, %v427
      %v431 = vadd.f32 %v430, %v428
      %432 = vadd.xlane.f32.xlu0 %v431
      %v433 = vpop.xlane.xlu0 %432
      %v434 = vrot.slane %v433, 4
      %v435 = vadd.f32 %v433, %v434
      %v436 = vrot.slane %v435, 2
      %v437 = vadd.f32 %v435, %v436
      %v438 = vrot.slane %v437, 1
      %v439 = vadd.f32 %v437, %v438
      %s440 = vtos %v439
      %v441 = vstv %s440
      %442 = vst [vmem:[%s213] sm:$0x1] %v441
      %p443 = scmp.lt.s32.totalorder %s15, 5
      %s444 = scalar_select %p443, %s15, 5
      %s445 = scalar_lea.vmem %s4, %s444
      // Predicated region
      $region37: #{_roi_composite_loss_impl.1} parent=35 // pred_check
        %p446 = pneg %p127
      $region38: #{_roi_composite_loss_impl.1} parent=35 // pred_check_branch
        %448 = sbr.rel (%p446) target = $region40
      $region39: #{_roi_composite_loss_impl.1} parent=35 // pred_region
        _
      $region40: #{_roi_composite_loss_impl.1} parent=35 // pred_fallthru
        _
    $region36: #{_roi_composite_loss_impl.1} parent=5 // pred_fallthru
      _
    %p449 = scmp.le.s32.totalorder 2, %s10
    // Predicated region
    $region41: #{_roi_composite_loss_impl.1} parent=5 // pred_check
      %p450 = pneg %p449
    $region42: #{_roi_composite_loss_impl.1} parent=5 // pred_check_branch
      %452 = sbr.rel (%p450) target = $region44
    $region43: #{_roi_composite_loss_impl.1} parent=5 // pred_region
      %s453 = ssub.s32 %s10, 2
      // Predicated region
      $region45: #{_roi_composite_loss_impl.1} parent=43 // pred_check
        %p454 = pneg %p133
      $region46: #{_roi_composite_loss_impl.1} parent=43 // pred_check_branch
        %456 = sbr.rel (%p454) target = $region48
      $region47: #{_roi_composite_loss_impl.1} parent=43 // pred_region
        %p457 = scmp.lt.s32.totalorder %s16, 5
        %s458 = scalar_select %p457, %s16, 5
        %s459 = scalar_lea.vmem %s4, %s458
      $region48: #{_roi_composite_loss_impl.1} parent=43 // pred_fallthru
        _
    $region44: #{_roi_composite_loss_impl.1} parent=5 // pred_fallthru
      _
  $region6: #{_roi_composite_loss_impl.1} parent=0 // loop_footer
    %s14 = sadd.s32 1, %s10
  $region7: #{_roi_composite_loss_impl.1} parent=0 // loop_footer_branch
    %9 = sbr.rel target = $region3
  $region8: #{_roi_composite_loss_impl.1} parent=0 // loop_exit
    _

</llo_original>
